<compile_context>
chip_gen: v7x
topology: tpu7x:2x2x1
jax: 0.10.0
libtpu: 0.0.40
codegen_flags: <defaults>
</compile_context>

<pallas_src>
import jax
import jax.numpy as jnp
from jax.experimental import pallas as pl
from jax.experimental.pallas import tpu as pltpu


def _round_up(a, b):
    return (a + b - 1) // b * b


def _cdiv(a, b):
    return (a + b - 1) // b


_SQRT_HALF = 0.7071067811865476


def _erf_poly(z):
    # Abramowitz & Stegun 7.1.26, max abs error ~1.5e-7.
    a1 = 0.254829592
    a2 = -0.284496736
    a3 = 1.421413741
    a4 = -1.453152027
    a5 = 1.061405429
    p = 0.3275911
    az = jnp.abs(z)
    # EUP reciprocal (separate issue slot) instead of a VALU divide chain.
    t = pl.reciprocal(1.0 + p * az, approx=True)
    poly = t * (a1 + t * (a2 + t * (a3 + t * (a4 + t * a5))))
    e = 1.0 - poly * jnp.exp(-az * az)
    return jnp.where(z < 0.0, -e, e)


def _gelu_exact(x):
    # x * Phi(x), matching nn.GELU() default (approximate='none').
    return 0.5 * x * (1.0 + _erf_poly(x * _SQRT_HALF))


# -----------------------------------------------------------------------------
# Kernels
# -----------------------------------------------------------------------------
def _mlp_kernel_fused(x_ref, w1_ref, b1_ref, w2_ref, b2_ref, o_ref):
    # Whole hidden dim resident: single step per token tile, no accumulator.
    h = jnp.dot(x_ref[...], w1_ref[...], preferred_element_type=jnp.float32)
    h = _gelu_exact(h + b1_ref[...])
    y = jnp.dot(h.astype(w2_ref.dtype), w2_ref[...],
                preferred_element_type=jnp.float32)
    o_ref[...] = (y + b2_ref[...]).astype(o_ref.dtype)


def _mlp_kernel_chunked_accout(x_ref, w1_ref, b1_ref, w2_ref, b2_ref, o_ref):
    # Hidden chunked, f32 output: accumulate directly into the resident o_ref.
    j = pl.program_id(1)

    @pl.when(j == 0)
    def _init():
        o_ref[...] = jnp.zeros_like(o_ref)

    h = jnp.dot(x_ref[...], w1_ref[...], preferred_element_type=jnp.float32)
    h = _gelu_exact(h + b1_ref[...])
    o_ref[...] += jnp.dot(h.astype(w2_ref.dtype), w2_ref[...],
                          preferred_element_type=jnp.float32)

    @pl.when(j == pl.num_programs(1) - 1)
    def _finalize():
        o_ref[...] = o_ref[...] + b2_ref[...]


def _mlp_kernel_chunked_scratch(x_ref, w1_ref, b1_ref, w2_ref, b2_ref, o_ref,
                                acc_ref):
    # Hidden chunked, non-f32 output: accumulate into an f32 VMEM scratch.
    j = pl.program_id(1)

    @pl.when(j == 0)
    def _init():
        acc_ref[...] = jnp.zeros_like(acc_ref)

    h = jnp.dot(x_ref[...], w1_ref[...], preferred_element_type=jnp.float32)
    h = _gelu_exact(h + b1_ref[...])
    acc_ref[...] += jnp.dot(h.astype(w2_ref.dtype), w2_ref[...],
                            preferred_element_type=jnp.float32)

    @pl.when(j == pl.num_programs(1) - 1)
    def _finalize():
        o_ref[...] = (acc_ref[...] + b2_ref[...]).astype(o_ref.dtype)


# -----------------------------------------------------------------------------
# Tile selection / VMEM budgeting
# -----------------------------------------------------------------------------
def _tile_footprint(tm, th, din, dout_p, xb, wb, ob, use_acc):
    # BlockSpec double-buffers each input/output block.
    f = 2 * tm * din * xb            # x tile
    f += 2 * din * th * wb           # W1 chunk
    f += 2 * th * dout_p * wb        # W2 chunk
    f += 2 * tm * dout_p * ob        # output tile
    f += 2 * (th + dout_p) * 4       # biases (f32)
    if use_acc:
        f += tm * dout_p * 4         # f32 accumulator scratch
    return f


def _select_tiles(m, din, hidden, dout_p, xb, wb, ob, out_is_f32, budget,
                  max_tm, force_th):
    tm_cap = min(max_tm, _round_up(m, 8))
    if m >= 16:
        # >= 2 token tiles so the "parallel" axis load-balances across the two
        # v7x TensorCores; ~one extra grid step elsewhere (weights are not
        # re-DMA'd when their block index is unchanged).
        tm_cap = min(tm_cap, _round_up(_cdiv(m, 2), 8))
    tm_cap = max(tm_cap, 8)
    tm_opts = sorted({tm_cap} | {t for t in (1024, 768, 512, 384, 256, 128,
                                             64, 32, 16, 8) if t <= tm_cap},
                     reverse=True)

    if force_th is not None:
        th = min(force_th, hidden)
        if th < hidden:
            th = max(128, (th // 128) * 128)   # lane-aligned chunk
            th = min(th, hidden)
        use_acc = (th < hidden) and not out_is_f32
        for tm in tm_opts:
            if _tile_footprint(tm, th, din, dout_p, xb, wb, ob, use_acc) <= budget:
                return tm, th
        return 8, th

    # Pass 1: keep the whole hidden dim resident (weights fetched exactly once
    # per token tile; no reduction axis, no accumulator).
    for tm in tm_opts:
        if _tile_footprint(tm, hidden, din, dout_p, xb, wb, ob, False) <= budget:
            return tm, hidden

    # Pass 2: chunk the hidden dim. Prefer chunk sizes that divide `hidden`
    # (no per-call weight padding) and are multiples of 256 (256x256 MXU on
    # v6e/v7x), then multiples of 128.
    max_th = (hidden // 128) * 128
    mults = list(range(max_th, 0, -128))
    divisors = [t for t in mults if hidden % t == 0]
    cands = ([t for t in divisors if t % 256 == 0]
             + [t for t in divisors if t % 256 != 0]
             + [t for t in mults if hidden % t != 0])
    if not cands:
        cands = [hidden]

    use_acc = not out_is_f32
    for tm in tm_opts:
        for th in cands:
            if _tile_footprint(tm, th, din, dout_p, xb, wb, ob, use_acc) <= budget:
                return tm, th
    return 8, cands[-1]


# -----------------------------------------------------------------------------
# Wrapper
# -----------------------------------------------------------------------------
def mlp_forward(x, w1, b1, w2, b2, *, matmul_dtype=None, max_block_m=1024,
                block_h=None, vmem_budget_bytes=48 << 20):
    """Fused MLP forward: gelu(x @ W1 + b1) @ W2 + b2.

    x : (..., Din)
    w1: (Din, H)   b1: (H,)      (fc1, transposed from torch (H, Din))
    w2: (H, Dout)  b2: (Dout,)
    matmul_dtype: optional dtype for the MXU inputs (e.g. jnp.bfloat16).
    block_h     : optional forced hidden chunk size (mainly for testing).
    vmem_budget_bytes: per-step VMEM target (48 MiB fits v7x's 64 MiB/TC;
                       raise on v6e's 128 MiB for even bigger tiles).
    """
    orig_shape = x.shape
    din, hidden = w1.shape
    dout = w2.shape[1]
    assert orig_shape[-1] == din
    out_dtype = x.dtype

    if matmul_dtype is not None:
        x = x.astype(matmul_dtype)
        w1 = w1.astype(matmul_dtype)
        w2 = w2.astype(matmul_dtype)

    m = 1
    for d in orig_shape[:-1]:
        m *= d
    x2 = x.reshape(m, din)

    # Lane-dense output: pad Dout to a multiple of 128 only when needed
    # (uncommon for real model dims; avoids masked partial stores).
    dout_p = dout if dout % 128 == 0 else _round_up(dout, 128)
    if dout_p != dout:
        w2 = jnp.pad(w2, ((0, 0), (0, dout_p - dout)))
        b2 = jnp.pad(b2, ((0, dout_p - dout),))

    xb = x2.dtype.itemsize
    wb = w1.dtype.itemsize
    ob = jnp.dtype(out_dtype).itemsize
    out_is_f32 = jnp.dtype(out_dtype) == jnp.dtype(jnp.float32)

    tm, th = _select_tiles(m, din, hidden, dout_p, xb, wb, ob, out_is_f32,
                           vmem_budget_bytes, max_block_m, block_h)

    # Hidden padding is only required if the chosen chunk does not divide H
    # (tile selection prefers divisors, so this is usually a no-op).
    hp = _round_up(hidden, th)
    if hp != hidden:
        # Padded hidden units contribute gelu(0)=0 through zero W2 rows.
        w1 = jnp.pad(w1, ((0, 0), (0, hp - hidden)))
        b1 = jnp.pad(b1, ((0, hp - hidden),))
        w2 = jnp.pad(w2, ((0, hp - hidden), (0, 0)))

    b1r = b1.reshape(1, hp).astype(jnp.float32)
    b2r = b2.reshape(1, dout_p).astype(jnp.float32)

    n_i = _cdiv(m, tm)
    n_j = hp // th
    use_acc_scratch = (n_j > 1) and not out_is_f32

    fp = _tile_footprint(tm, th, din, dout_p, xb, wb, ob, use_acc_scratch)
    vmem_limit = int(max(32 << 20, min(fp * 1.2 + (2 << 20), 100 << 20)))

    out_shape = jax.ShapeDtypeStruct((m, dout_p), out_dtype)

    if n_j == 1:
        out = pl.pallas_call(
            _mlp_kernel_fused,
            out_shape=out_shape,
            grid=(n_i,),
            in_specs=[
                pl.BlockSpec((tm, din), lambda i: (i, 0)),      # x tile
                pl.BlockSpec((din, hp), lambda i: (0, 0)),      # W1 (resident)
                pl.BlockSpec((1, hp), lambda i: (0, 0)),        # b1
                pl.BlockSpec((hp, dout_p), lambda i: (0, 0)),   # W2 (resident)
                pl.BlockSpec((1, dout_p), lambda i: (0, 0)),    # b2
            ],
            out_specs=pl.BlockSpec((tm, dout_p), lambda i: (i, 0)),
            compiler_params=pltpu.CompilerParams(
                dimension_semantics=("parallel",),
                vmem_limit_bytes=vmem_limit),
        )(x2, w1, b1r, w2, b2r)
    else:
        kernel = (_mlp_kernel_chunked_accout if out_is_f32
                  else _mlp_kernel_chunked_scratch)
        scratch = ([] if out_is_f32
                   else [pltpu.VMEM((tm, dout_p), jnp.float32)])
        out = pl.pallas_call(
            kernel,
            out_shape=out_shape,
            grid=(n_i, n_j),
            in_specs=[
                pl.BlockSpec((tm, din), lambda i, j: (i, 0)),     # x tile
                pl.BlockSpec((din, th), lambda i, j: (0, j)),     # W1 chunk
                pl.BlockSpec((1, th), lambda i, j: (0, j)),       # b1 chunk
                pl.BlockSpec((th, dout_p), lambda i, j: (j, 0)),  # W2 chunk
                pl.BlockSpec((1, dout_p), lambda i, j: (0, 0)),   # b2
            ],
            out_specs=pl.BlockSpec((tm, dout_p), lambda i, j: (i, 0)),
            scratch_shapes=scratch,
            compiler_params=pltpu.CompilerParams(
                dimension_semantics=("parallel", "arbitrary"),
                vmem_limit_bytes=vmem_limit),
        )(x2, w1, b1r, w2, b2r)

    if dout_p != dout:
        out = out[:, :dout]
    return out.reshape(*orig_shape[:-1], dout)


# -----------------------------------------------------------------------------
# Pure-JAX reference (exact erf GELU; Dropout(0.0) is the identity).
# -----------------------------------------------------------------------------
def mlp_reference(x, w1, b1, w2, b2):
    h = jnp.dot(x, w1, preferred_element_type=jnp.float32) + b1
    h = jax.nn.gelu(h, approximate=False)
    y = jnp.dot(h.astype(w2.dtype), w2, preferred_element_type=jnp.float32) + b2
    return y.astype(x.dtype)


# -----------------------------------------------------------------------------
# Deterministic parameter init (PyTorch Linear stores (out, in); we transpose).
# TODO(synk): DynamicLinear's channel-search slicing (c_mult_idx / side) is not
# implemented; the module's forward uses c_mult_idx=None -> plain Linear.
# -----------------------------------------------------------------------------
def make_params(key, din, hidden, dout):
    k1, k2, k3, k4 = jax.random.split(key, 4)
    w1_t = jax.random.normal(k1, (hidden, din), jnp.float32) / (din ** 0.5)
    b1 = 0.1 * jax.random.normal(k2, (hidden,), jnp.float32)
    w2_t = jax.random.normal(k3, (dout, hidden), jnp.float32) / (hidden ** 0.5)
    b2 = 0.1 * jax.random.normal(k4, (dout,), jnp.float32)
    return {"w1": w1_t.T, "b1": b1, "w2": w2_t.T, "b2": b2}


if __name__ == "__main__":
    key = jax.random.PRNGKey(0)
    kx1, kp1, kx2, kp2, kx3, kp3 = jax.random.split(key, 6)

    # 1) Small transformer-MLP shapes: single hidden step (fused fast path),
    #    >=2 token tiles, non-128-multiple dout (lane-padding path).
    B, S, D, Hd, Do = 2, 8, 32, 64, 32
    x = jax.random.normal(kx1, (B, S, D), jnp.float32)
    p = make_params(kp1, D, Hd, Do)
    out = jax.block_until_ready(
        mlp_forward(x, p["w1"], p["b1"], p["w2"], p["b2"]))
    ref = jax.block_until_ready(
        mlp_reference(x, p["w1"], p["b1"], p["w2"], p["b2"]))
    assert out.shape == ref.shape == (B, S, Do)
    assert jnp.allclose(out, ref, atol=5e-3, rtol=5e-3), \
        float(jnp.max(jnp.abs(out - ref)))

    # 2) Ragged token tiles + forced hidden chunking (accumulate-in-output
    #    path) + hidden padding (320 % 128 != 0) + non-128 dout.
    B2, S2, D2, H2, Do2 = 2, 300, 96, 320, 80
    x2 = jax.random.normal(kx2, (B2, S2, D2), jnp.float32)
    p2 = make_params(kp2, D2, H2, Do2)
    out2 = jax.block_until_ready(
        mlp_forward(x2, p2["w1"], p2["b1"], p2["w2"], p2["b2"], block_h=128))
    ref2 = jax.block_until_ready(
        mlp_reference(x2, p2["w1"], p2["b1"], p2["w2"], p2["b2"]))
    assert out2.shape == ref2.shape == (B2, S2, Do2)
    assert jnp.allclose(out2, ref2, atol=5e-3, rtol=5e-3), \
        float(jnp.max(jnp.abs(out2 - ref2)))

    # 3) bf16 inputs/weights (MXU-friendly path), chunked hidden with bf16
    #    output -> f32 scratch-accumulator kernel.
    B3, S3, D3, H3, Do3 = 2, 64, 128, 256, 128
    x3 = jax.random.normal(kx3, (B3, S3, D3), jnp.float32).astype(jnp.bfloat16)
    p3 = make_params(kp3, D3, H3, Do3)
    w1b = p3["w1"].astype(jnp.bfloat16)
    w2b = p3["w2"].astype(jnp.bfloat16)
    out3 = jax.block_until_ready(
        mlp_forward(x3, w1b, p3["b1"], w2b, p3["b2"], block_h=128))
    ref3 = jax.block_until_ready(
        mlp_reference(x3, w1b, p3["b1"], w2b, p3["b2"]))
    assert out3.shape == ref3.shape == (B3, S3, Do3)
    o3 = out3.astype(jnp.float32)
    r3 = ref3.astype(jnp.float32)
    assert jnp.allclose(o3, r3, atol=2e-2, rtol=2e-2), \
        float(jnp.max(jnp.abs(o3 - r3)))

    print("KERNEL_OK")
</pallas_src>

<mosaic_0001>
module attributes {stable_mosaic.version = 11 : i64} {
  func.func @_mlp_kernel_fused(%arg0: i32, %arg1: memref<8x32xf32, #tpu.memory_space<vmem>>, %arg2: memref<32x64xf32, #tpu.memory_space<vmem>>, %arg3: memref<1x64xf32, #tpu.memory_space<vmem>>, %arg4: memref<64x128xf32, #tpu.memory_space<vmem>>, %arg5: memref<1x128xf32, #tpu.memory_space<vmem>>, %arg6: memref<8x128xf32, #tpu.memory_space<vmem>>) attributes {dimension_semantics = [#tpu.dimension_semantics<parallel>], iteration_bounds = array<i64: 2>, scalar_prefetch = 0 : i64, scratch_operands = 0 : i64, tpu.core_type = #tpu.core_type<tc>, window_params = [{transform_indices = @transform_0, window_bounds = array<i64: 8, 32>}, {pipeline_mode = #tpu.pipeline_mode<synchronous>, transform_indices = @transform_1, window_bounds = array<i64: 32, 64>}, {pipeline_mode = #tpu.pipeline_mode<synchronous>, transform_indices = @transform_2, window_bounds = array<i64: 1, 64>}, {pipeline_mode = #tpu.pipeline_mode<synchronous>, transform_indices = @transform_3, window_bounds = array<i64: 64, 128>}, {pipeline_mode = #tpu.pipeline_mode<synchronous>, transform_indices = @transform_4, window_bounds = array<i64: 1, 128>}, {transform_indices = @transform_5, window_bounds = array<i64: 8, 128>}]} {
    %c0 = arith.constant 0 : index
    %c0_0 = arith.constant 0 : index
    %0 = vector.load %arg1[%c0, %c0_0] : memref<8x32xf32, #tpu.memory_space<vmem>>, vector<8x32xf32>
    %c0_1 = arith.constant 0 : index
    %c0_2 = arith.constant 0 : index
    %1 = vector.load %arg2[%c0_1, %c0_2] : memref<32x64xf32, #tpu.memory_space<vmem>>, vector<32x64xf32>
    %cst = arith.constant dense<0.000000e+00> : vector<8x64xf32>
    %2 = tpu.matmul %0, %1, %cst {dimension_numbers = #tpu.dot_dimension_numbers<[1], [0], [0], [1], [0, 0, 1, 1], [], []>} : vector<8x32xf32>, vector<32x64xf32>, vector<8x64xf32> -> vector<8x64xf32>
    %c0_3 = arith.constant 0 : index
    %c0_4 = arith.constant 0 : index
    %3 = vector.load %arg3[%c0_3, %c0_4] : memref<1x64xf32, #tpu.memory_space<vmem>>, vector<1x64xf32>
    %4 = vector.broadcast %3 : vector<1x64xf32> to vector<8x64xf32>
    %5 = arith.addf %2, %4 : vector<8x64xf32>
    %cst_5 = arith.constant 5.000000e-01 : f32
    %6 = vector.broadcast %cst_5 : f32 to vector<8x64xf32>
    %7 = arith.mulf %6, %5 : vector<8x64xf32>
    %cst_6 = arith.constant 0.707106769 : f32
    %8 = vector.broadcast %cst_6 : f32 to vector<8x64xf32>
    %9 = arith.mulf %5, %8 : vector<8x64xf32>
    %10 = math.absf %9 : vector<8x64xf32>
    %cst_7 = arith.constant 0.327591091 : f32
    %11 = vector.broadcast %cst_7 : f32 to vector<8x64xf32>
    %12 = arith.mulf %11, %10 : vector<8x64xf32>
    %cst_8 = arith.constant 1.000000e+00 : f32
    %13 = vector.broadcast %cst_8 : f32 to vector<8x64xf32>
    %14 = arith.addf %13, %12 : vector<8x64xf32>
    %15 = tpu.reciprocal %14 {approx = true} : vector<8x64xf32> -> vector<8x64xf32>
    %cst_9 = arith.constant 1.06140542 : f32
    %16 = vector.broadcast %cst_9 : f32 to vector<8x64xf32>
    %17 = arith.mulf %15, %16 : vector<8x64xf32>
    %cst_10 = arith.constant -1.45315206 : f32
    %18 = vector.broadcast %cst_10 : f32 to vector<8x64xf32>
    %19 = arith.addf %18, %17 : vector<8x64xf32>
    %20 = arith.mulf %15, %19 : vector<8x64xf32>
    %cst_11 = arith.constant 1.42141378 : f32
    %21 = vector.broadcast %cst_11 : f32 to vector<8x64xf32>
    %22 = arith.addf %21, %20 : vector<8x64xf32>
    %23 = arith.mulf %15, %22 : vector<8x64xf32>
    %cst_12 = arith.constant -0.284496725 : f32
    %24 = vector.broadcast %cst_12 : f32 to vector<8x64xf32>
    %25 = arith.addf %24, %23 : vector<8x64xf32>
    %26 = arith.mulf %15, %25 : vector<8x64xf32>
    %cst_13 = arith.constant 0.254829586 : f32
    %27 = vector.broadcast %cst_13 : f32 to vector<8x64xf32>
    %28 = arith.addf %27, %26 : vector<8x64xf32>
    %29 = arith.mulf %15, %28 : vector<8x64xf32>
    %cst_14 = arith.constant 0.000000e+00 : f32
    %30 = vector.broadcast %cst_14 : f32 to vector<8x64xf32>
    %31 = arith.subf %30, %10 : vector<8x64xf32>
    %32 = arith.mulf %31, %10 : vector<8x64xf32>
    %33 = math.exp %32 : vector<8x64xf32>
    %34 = arith.mulf %29, %33 : vector<8x64xf32>
    %cst_15 = arith.constant 1.000000e+00 : f32
    %35 = vector.broadcast %cst_15 : f32 to vector<8x64xf32>
    %36 = arith.subf %35, %34 : vector<8x64xf32>
    %cst_16 = arith.constant 0.000000e+00 : f32
    %37 = vector.broadcast %cst_16 : f32 to vector<8x64xf32>
    %38 = arith.cmpf olt, %9, %37 : vector<8x64xf32>
    %cst_17 = arith.constant 0.000000e+00 : f32
    %39 = vector.broadcast %cst_17 : f32 to vector<8x64xf32>
    %40 = arith.subf %39, %36 : vector<8x64xf32>
    %41 = arith.select %38, %40, %36 : vector<8x64xi1>, vector<8x64xf32>
    %cst_18 = arith.constant 1.000000e+00 : f32
    %42 = vector.broadcast %cst_18 : f32 to vector<8x64xf32>
    %43 = arith.addf %42, %41 : vector<8x64xf32>
    %44 = arith.mulf %7, %43 : vector<8x64xf32>
    %c0_19 = arith.constant 0 : index
    %c0_20 = arith.constant 0 : index
    %45 = vector.load %arg4[%c0_19, %c0_20] : memref<64x128xf32, #tpu.memory_space<vmem>>, vector<64x128xf32>
    %cst_21 = arith.constant dense<0.000000e+00> : vector<8x128xf32>
    %46 = tpu.matmul %44, %45, %cst_21 {dimension_numbers = #tpu.dot_dimension_numbers<[1], [0], [0], [1], [0, 0, 1, 1], [], []>} : vector<8x64xf32>, vector<64x128xf32>, vector<8x128xf32> -> vector<8x128xf32>
    %c0_22 = arith.constant 0 : index
    %c0_23 = arith.constant 0 : index
    %47 = vector.load %arg5[%c0_22, %c0_23] : memref<1x128xf32, #tpu.memory_space<vmem>>, vector<1x128xf32>
    %48 = vector.broadcast %47 : vector<1x128xf32> to vector<8x128xf32>
    %49 = arith.addf %46, %48 : vector<8x128xf32>
    %c0_24 = arith.constant 0 : index
    %c0_25 = arith.constant 0 : index
    %50 = vector.load %arg6[%c0_24, %c0_25] : memref<8x128xf32, #tpu.memory_space<vmem>>, vector<8x128xf32>
    tpu.vector_store %arg6[%c0_24, %c0_25], %49 {strides = array<i32>} : memref<8x128xf32, #tpu.memory_space<vmem>>, vector<8x128xf32>,
    return
  }
  func.func @transform_0(%arg0: i32) -> (i32, i32) {
    %c0_i32 = arith.constant 0 : i32
    %c0_i32_0 = arith.constant 0 : i32
    return %arg0, %c0_i32 : i32, i32
  }
  func.func @transform_1(%arg0: i32) -> (i32, i32) {
    %c0_i32 = arith.constant 0 : i32
    %c0_i32_0 = arith.constant 0 : i32
    %c0_i32_1 = arith.constant 0 : i32
    return %c0_i32, %c0_i32_0 : i32, i32
  }
  func.func @transform_2(%arg0: i32) -> (i32, i32) {
    %c0_i32 = arith.constant 0 : i32
    %c0_i32_0 = arith.constant 0 : i32
    %c0_i32_1 = arith.constant 0 : i32
    return %c0_i32, %c0_i32_0 : i32, i32
  }
  func.func @transform_3(%arg0: i32) -> (i32, i32) {
    %c0_i32 = arith.constant 0 : i32
    %c0_i32_0 = arith.constant 0 : i32
    %c0_i32_1 = arith.constant 0 : i32
    return %c0_i32, %c0_i32_0 : i32, i32
  }
  func.func @transform_4(%arg0: i32) -> (i32, i32) {
    %c0_i32 = arith.constant 0 : i32
    %c0_i32_0 = arith.constant 0 : i32
    %c0_i32_1 = arith.constant 0 : i32
    return %c0_i32, %c0_i32_0 : i32, i32
  }
  func.func @transform_5(%arg0: i32) -> (i32, i32) {
    %c0_i32 = arith.constant 0 : i32
    %c0_i32_0 = arith.constant 0 : i32
    return %arg0, %c0_i32 : i32, i32
  }
}

</mosaic_0001>

<llo_original>
// kernel: tpu_custom_call.1
$region0: #{tpu_custom_call.1}
  #allocation0 [shape = 'u32[]', space=smem, size = 0x4, offset = 0x4, fixed_abs, tag = 'smem constant byte address 0x4 - core index']
  #allocation1 [shape = 'u32[144,128]{1,0:T(1,128)}', space=vmem, size = 0x12000, scoped, tag = 'internal scratch']
  %s0 = inlined_call_operand.hbm [shape: f32[16,32], index: 0, kind: input, shape index: {}]
  %s1 = inlined_call_operand.hbm [shape: f32[32,64], index: 1, kind: input, shape index: {}]
  %s2 = inlined_call_operand.vmem [shape: f32[1,64], index: 2, kind: input, shape index: {}]
  %s3 = inlined_call_operand.hbm [shape: f32[64,128], index: 3, kind: input, shape index: {}]
  %s4 = inlined_call_operand.vmem [shape: f32[1,128], index: 4, kind: input, shape index: {}]
  %s5 = inlined_call_operand.hbm [shape: f32[16,128], index: 5, kind: output, shape index: {}]
  %s6 = sld [smem:[#allocation0]]
  $region65: #{tpu_custom_call.1} parent=0
    _
  %s8 = ssub.s32 1, %s6
  %s9 = scalar_select 0, %s8, %s6
  $region1: #{tpu_custom_call.1} parent=0
    #allocation2 [shape = 'u8[8192]{0}', space=vmem, size = 0x2000, scoped, tag = 'input window, operand 0']
    #allocation3 [shape = 's32[2]{0}', space=sflag, size = 0x8, scoped, tag = 'scoped memory for tpu_custom_call.1']
    #allocation4 [shape = 's32[2]{0}', space=sflag, size = 0x8, scoped, tag = 'scoped memory for tpu_custom_call.1']
    #allocation5 [shape = 'u8[16384]{0}', space=vmem, size = 0x4000, scoped, tag = 'input window, operand 1, single buffered']
    #allocation6 [shape = 's32[1]{0}', space=sflag, size = 0x4, scoped, tag = 'scoped memory for tpu_custom_call.1']
    #allocation7 [shape = 'u8[32768]{0}', space=vmem, size = 0x8000, scoped, tag = 'input window, operand 3, single buffered']
    #allocation8 [shape = 'u8[8192]{0}', space=vmem, size = 0x2000, scoped, tag = 'output window, operand 0']
    %10 = vsyncpa [#allocation3], 0
    %s11 = scalar_lea.sflag [#allocation3], 1
    %12 = vsyncpa %s11, 0
    %13 = vsyncpa [#allocation6], 0
    %14 = vsyncpa [#allocation4], 0
    %s15 = scalar_lea.sflag [#allocation4], 1
    %16 = vsyncpa %s15, 0
    loop: start=0, step=1, limit=4
    $region2: #{tpu_custom_call.1} parent=1 // loop_pre_header
      _
    $region3: #{tpu_custom_call.1} parent=1 // loop_header
      %s18 = sphi 0, %s22
      %p19 = scmp.ge.s32.totalorder %s18, 4
      %s28 = sphi 0, %s30
      %s31 = sphi 0, %s28
      %s32 = sphi 0, %s31
      %s48 = sphi 0, %s32
      %s52 = sphi 0, %s52
      %s54 = sphi 0, %s52
      %s55 = sphi 0, %s54
      %s69 = sphi 0, %s55
      %s73 = sphi 0, %s73
      %s75 = sphi 0, %s73
      %s76 = sphi 0, %s75
      %s90 = sphi 0, %s76
      %s94 = sphi 0, %s94
      %s96 = sphi 0, %s94
      %s97 = sphi 0, %s96
      %s111 = sphi 0, %s97
      %s115 = sphi 0, %s115
      %s117 = sphi 0, %s115
      %s118 = sphi 0, %s117
      %s132 = sphi 0, %s118
      %s138 = sphi 0, %s140
      %s141 = sphi 0, %s138
      %s142 = sphi 0, %s141
      %s158 = sphi 0, %s142
    $region4: #{tpu_custom_call.1} parent=1 // loop_header_branch
      %21 = sbr.rel (%p19) target = $region8
    $region5: #{tpu_custom_call.1} parent=1 // loop_body
      %s23 = ssub.s32 %s18, 1
      %s24 = ssub.s32 %s18, 2
      %s25 = sadd.s32 %s18, 1
      %s26 = ssub.s32 %s18, %s25
      %p27 = scmp.eq.s32.totalorder %s26, 0
      %s29 = sadd.s32 %s28, 1
      %s30 = scalar_select %p27, %s28, %s29
      %p33 = pneg %p27
      %p34 = scmp.eq.s32.totalorder %s18, 1
      %p35 = por %p33, %p34
      %p36 = scmp.ne.s32.totalorder %s28, %s31
      %p37 = scmp.eq.s32.totalorder %s18, 0
      %p38 = por %p36, %p37
      %p39 = scmp.ne.s32.totalorder %s28, %s31
      %p40 = scmp.eq.s32.totalorder %s23, 1
      %p41 = por %p39, %p40
      %p42 = scmp.ne.s32.totalorder %s31, %s32
      %p43 = scmp.eq.s32.totalorder %s23, 0
      %p44 = por %p42, %p43
      %p45 = scmp.ne.s32.totalorder %s31, %s32
      %p46 = scmp.eq.s32.totalorder %s24, 1
      %p47 = por %p45, %p46
      %p49 = scmp.ne.s32.totalorder %s32, %s48
      %p50 = scmp.eq.s32.totalorder %s24, 0
      %p51 = por %p49, %p50
      %s53 = sadd.s32 %s52, 1
      %p56 = scmp.eq.s32.totalorder %s18, 1
      %p57 = scmp.ne.s32.totalorder %s52, %s54
      %p58 = scmp.eq.s32.totalorder %s18, 0
      %p59 = por %p57, %p58
      %p60 = scmp.ne.s32.totalorder %s52, %s54
      %p61 = scmp.eq.s32.totalorder %s23, 1
      %p62 = por %p60, %p61
      %p63 = scmp.ne.s32.totalorder %s54, %s55
      %p64 = scmp.eq.s32.totalorder %s23, 0
      %p65 = por %p63, %p64
      %p66 = scmp.ne.s32.totalorder %s54, %s55
      %p67 = scmp.eq.s32.totalorder %s24, 1
      %p68 = por %p66, %p67
      %p70 = scmp.ne.s32.totalorder %s55, %s69
      %p71 = scmp.eq.s32.totalorder %s24, 0
      %p72 = por %p70, %p71
      %s74 = sadd.s32 %s73, 1
      %p77 = scmp.eq.s32.totalorder %s18, 1
      %p78 = scmp.ne.s32.totalorder %s73, %s75
      %p79 = scmp.eq.s32.totalorder %s18, 0
      %p80 = por %p78, %p79
      %p81 = scmp.ne.s32.totalorder %s73, %s75
      %p82 = scmp.eq.s32.totalorder %s23, 1
      %p83 = por %p81, %p82
      %p84 = scmp.ne.s32.totalorder %s75, %s76
      %p85 = scmp.eq.s32.totalorder %s23, 0
      %p86 = por %p84, %p85
      %p87 = scmp.ne.s32.totalorder %s75, %s76
      %p88 = scmp.eq.s32.totalorder %s24, 1
      %p89 = por %p87, %p88
      %p91 = scmp.ne.s32.totalorder %s76, %s90
      %p92 = scmp.eq.s32.totalorder %s24, 0
      %p93 = por %p91, %p92
      %s95 = sadd.s32 %s94, 1
      %p98 = scmp.eq.s32.totalorder %s18, 1
      %p99 = scmp.ne.s32.totalorder %s94, %s96
      %p100 = scmp.eq.s32.totalorder %s18, 0
      %p101 = por %p99, %p100
      %p102 = scmp.ne.s32.totalorder %s94, %s96
      %p103 = scmp.eq.s32.totalorder %s23, 1
      %p104 = por %p102, %p103
      %p105 = scmp.ne.s32.totalorder %s96, %s97
      %p106 = scmp.eq.s32.totalorder %s23, 0
      %p107 = por %p105, %p106
      %p108 = scmp.ne.s32.totalorder %s96, %s97
      %p109 = scmp.eq.s32.totalorder %s24, 1
      %p110 = por %p108, %p109
      %p112 = scmp.ne.s32.totalorder %s97, %s111
      %p113 = scmp.eq.s32.totalorder %s24, 0
      %p114 = por %p112, %p113
      %s116 = sadd.s32 %s115, 1
      %p119 = scmp.eq.s32.totalorder %s18, 1
      %p120 = scmp.ne.s32.totalorder %s115, %s117
      %p121 = scmp.eq.s32.totalorder %s18, 0
      %p122 = por %p120, %p121
      %p123 = scmp.ne.s32.totalorder %s115, %s117
      %p124 = scmp.eq.s32.totalorder %s23, 1
      %p125 = por %p123, %p124
      %p126 = scmp.ne.s32.totalorder %s117, %s118
      %p127 = scmp.eq.s32.totalorder %s23, 0
      %p128 = por %p126, %p127
      %p129 = scmp.ne.s32.totalorder %s117, %s118
      %p130 = scmp.eq.s32.totalorder %s24, 1
      %p131 = por %p129, %p130
      %p133 = scmp.ne.s32.totalorder %s118, %s132
      %p134 = scmp.eq.s32.totalorder %s24, 0
      %p135 = por %p133, %p134
      %s136 = ssub.s32 %s18, %s25
      %p137 = scmp.eq.s32.totalorder %s136, 0
      %s139 = sadd.s32 %s138, 1
      %s140 = scalar_select %p137, %s138, %s139
      %p143 = pneg %p137
      %p144 = scmp.eq.s32.totalorder %s18, 1
      %p145 = por %p143, %p144
      %p146 = scmp.ne.s32.totalorder %s138, %s141
      %p147 = scmp.eq.s32.totalorder %s18, 0
      %p148 = por %p146, %p147
      %p149 = scmp.ne.s32.totalorder %s138, %s141
      %p150 = scmp.eq.s32.totalorder %s23, 1
      %p151 = por %p149, %p150
      %p152 = scmp.ne.s32.totalorder %s141, %s142
      %p153 = scmp.eq.s32.totalorder %s23, 0
      %p154 = por %p152, %p153
      %p155 = scmp.ne.s32.totalorder %s141, %s142
      %p156 = scmp.eq.s32.totalorder %s24, 1
      %p157 = por %p155, %p156
      %p159 = scmp.ne.s32.totalorder %s142, %s158
      %p160 = scmp.eq.s32.totalorder %s24, 0
      %p161 = por %p159, %p160
      %p162 = scmp.le.s32.totalorder 1, %s18
      %p163 = scmp.lt.s32.totalorder %s18, 3
      %p164 = pnand %p162, %p163
      %p165 = pneg %p164
      // Predicated region
      $region9: #{tpu_custom_call.1} parent=5 // pred_check
        _
      $region10: #{tpu_custom_call.1} parent=5 // pred_check_branch
        %167 = sbr.rel (%p164) target = $region12
      $region11: #{tpu_custom_call.1} parent=5 // pred_region
        %s168 = ssub.s32 %s18, 1
        // Predicated region
        $region13: #{tpu_custom_call.1} parent=11 // pred_check
          %p169 = pneg %p65
        $region14: #{tpu_custom_call.1} parent=11 // pred_check_branch
          %171 = sbr.rel (%p169) target = $region16
        $region15: #{tpu_custom_call.1} parent=11 // pred_region
          %s173 = ssub.s32 512, 512
          %174 = vsyncadd [#allocation6], %s173
          %s175 = sshll.u32 [#allocation5], 4
          %s176 = int_to_ptr.vmem [resolvable:$true] %s175
          %181 = dma.hbm_to_vmem [thread:$0]  %s1, 512, %s176, [#allocation6], 128, 128, 8
        $region16: #{tpu_custom_call.1} parent=11 // pred_fallthru
          _
        // Predicated region
        $region17: #{tpu_custom_call.1} parent=11 // pred_check
          %p182 = pneg %p86
        $region18: #{tpu_custom_call.1} parent=11 // pred_check_branch
          %184 = sbr.rel (%p182) target = $region20
        $region19: #{tpu_custom_call.1} parent=11 // pred_region
          _
        $region20: #{tpu_custom_call.1} parent=11 // pred_fallthru
          _
        // Predicated region
        $region21: #{tpu_custom_call.1} parent=11 // pred_check
          %p185 = pneg %p107
        $region22: #{tpu_custom_call.1} parent=11 // pred_check_branch
          %187 = sbr.rel (%p185) target = $region24
        $region23: #{tpu_custom_call.1} parent=11 // pred_region
          %s189 = ssub.s32 1024, 1024
          %190 = vsyncadd [#allocation6], %s189
          %s191 = sshll.u32 [#allocation7], 4
          %s192 = int_to_ptr.vmem [resolvable:$true] %s191
          %197 = dma.hbm_to_vmem [thread:$0]  %s3, 1024, %s192, [#allocation6], 128, 128, 8
        $region24: #{tpu_custom_call.1} parent=11 // pred_fallthru
          _
        // Predicated region
        $region25: #{tpu_custom_call.1} parent=11 // pred_check
          %p198 = pneg %p128
        $region26: #{tpu_custom_call.1} parent=11 // pred_check_branch
          %200 = sbr.rel (%p198) target = $region28
        $region27: #{tpu_custom_call.1} parent=11 // pred_region
          _
        $region28: #{tpu_custom_call.1} parent=11 // pred_fallthru
          _
      $region12: #{tpu_custom_call.1} parent=5 // pred_fallthru
        _
      %p201 = scmp.lt.s32.totalorder %s18, 2
      // Predicated region
      $region29: #{tpu_custom_call.1} parent=5 // pred_check
        %p202 = pneg %p201
      $region30: #{tpu_custom_call.1} parent=5 // pred_check_branch
        %204 = sbr.rel (%p202) target = $region32
      $region31: #{tpu_custom_call.1} parent=5 // pred_region
        // Predicated region
        $region33: #{tpu_custom_call.1} parent=31 // pred_check
          %p205 = pneg %p38
        $region34: #{tpu_custom_call.1} parent=31 // pred_check_branch
          %207 = sbr.rel (%p205) target = $region36
        $region35: #{tpu_custom_call.1} parent=31 // pred_region
          %s208 = sand.u32 %s28, 1
          %s209 = scalar_lea.sflag [#allocation3], %s208
          %s210 = sand.u32 %s28, 1
          %s211 = smul.addr %s210, 8
          %s212 = scalar_lea.vmem [#allocation2], %s211
          %s214 = ssub.s32 128, 128
          %215 = vsyncadd %s209, %s214
          %s216 = smul.addr %s18, 128
          %s217 = scalar_lea.hbm %s0, %s216
          %s219 = sshll.u32 %s212, 4
          %s220 = int_to_ptr.vmem [resolvable:$true] %s219
          %222 = dma.hbm_to_vmem [thread:$0]  %s217, 128, %s220, %s209
        $region36: #{tpu_custom_call.1} parent=31 // pred_fallthru
          _
      $region32: #{tpu_custom_call.1} parent=5 // pred_fallthru
        _
      %p223 = scmp.le.s32.totalorder 1, %s18
      %p224 = scmp.lt.s32.totalorder %s18, 3
      %p225 = pnand %p223, %p224
      %p226 = pneg %p225
      // Predicated region
      $region37: #{tpu_custom_call.1} parent=5 // pred_check
        _
      $region38: #{tpu_custom_call.1} parent=5 // pred_check_branch
        %228 = sbr.rel (%p225) target = $region40
      $region39: #{tpu_custom_call.1} parent=5 // pred_region
        %s229 = ssub.s32 %s18, 1
        %s230 = sand.u32 %s31, 1
        %s231 = scalar_lea.sflag [#allocation3], %s230
        %s232 = sand.u32 %s31, 1
        %s233 = smul.addr %s232, 8
        %s234 = scalar_lea.vmem [#allocation2], %s233
        // Predicated region
        $region41: #{tpu_custom_call.1} parent=39 // pred_check
          %p235 = pneg %p44
        $region42: #{tpu_custom_call.1} parent=39 // pred_check_branch
          %237 = sbr.rel (%p235) target = $region44
        $region43: #{tpu_custom_call.1} parent=39 // pred_region
          %238 = dma.done %s231, 128
        $region44: #{tpu_custom_call.1} parent=39 // pred_fallthru
          _
        // Predicated region
        $region45: #{tpu_custom_call.1} parent=39 // pred_check
          %p239 = pneg %p65
        $region46: #{tpu_custom_call.1} parent=39 // pred_check_branch
          %241 = sbr.rel (%p239) target = $region48
        $region47: #{tpu_custom_call.1} parent=39 // pred_region
          %242 = dma.done [#allocation6], 512
        $region48: #{tpu_custom_call.1} parent=39 // pred_fallthru
          _
        // Predicated region
        $region49: #{tpu_custom_call.1} parent=39 // pred_check
          %p243 = pneg %p107
        $region50: #{tpu_custom_call.1} parent=39 // pred_check_branch
          %245 = sbr.rel (%p243) target = $region52
        $region51: #{tpu_custom_call.1} parent=39 // pred_region
          %246 = dma.done [#allocation6], 1024
        $region52: #{tpu_custom_call.1} parent=39 // pred_fallthru
          _
        %s247 = sand.u32 %s31, 1
        %s248 = scalar_lea.sflag [#allocation3], %s247
        %s249 = sand.u32 %s31, 1
        %s250 = smul.addr %s249, 8
        %s251 = scalar_lea.vmem [#allocation2], %s250
        %p252 = pneg %p44
        %p253 = pneg %p41
        %p254 = pneg %p65
        %p255 = pneg %p62
        %p256 = pneg %p86
        %p257 = pneg %p83
        %p258 = pneg %p107
        %p259 = pneg %p104
        %p260 = pneg %p128
        %p261 = pneg %p125
        %p262 = pneg %p154
        %p263 = pneg %p151
        %s264 = sand.u32 %s141, 1
        %s265 = scalar_lea.sflag [#allocation4], %s264
        %s266 = sand.u32 %s141, 1
        %s267 = smul.addr %s266, 8
        %s268 = scalar_lea.vmem [#allocation8], %s267
        %v269 = vld [vmem:[%s234] sm:$0xff]
        %v270 = vld [vmem:[#allocation5] sm:$0xff]
        %v271 = vld [vmem:[#allocation5 + $0x8] sm:$0xff]
        %v272 = vld [vmem:[#allocation5 + $0x10] sm:$0xff]
        %v273 = vld [vmem:[#allocation5 + $0x18] sm:$0xff]
        %v274 = vld [vmem:[%s2] sm:$0x1]
        %v276 = vlaneseq
        %v277 = vshrl.u32 %v276, 7
        %v278 = vsub.s32 0, %v277
        %v279 = vrot.slane %v274, %v278
        %vm281 = vcmask 261120
        %v283 = vsel %vm281, %v269, 0
        %285 = vmatprep.subr.mxu0 0.0
        %286 = vmatpush1.msra.mxu0 %v270
        %287 = vmatprep.subr.mxu0 0.0
        %288 = vmatpush1.msra.mxu0 %v271
        %289 = vmatprep.subr.mxu0 0.0
        %290 = vmatpush1.msra.mxu0 %v272
        %291 = vmatprep.subr.mxu0 0.0
        %292 = vmatpush1.msra.mxu0 %v273
        %293 = vmatprep.subr.mxu0 0.0
        %294 = vmatpush1.msra.mxu0 0.0
        %295 = vmatprep.subr.mxu0 0.0
        %296 = vmatpush1.msra.mxu0 0.0
        %297 = vmatprep.subr.mxu0 0.0
        %298 = vmatpush1.msra.mxu0 0.0
        %299 = vmatprep.subr.mxu0 0.0
        %300 = vmatpush1.msra.mxu0 0.0
        %301 = vmatprep.subr.mxu0 0.0
        %302 = vmatpush1.msra.mxu0 0.0
        %303 = vmatprep.subr.mxu0 0.0
        %304 = vmatpush1.msra.mxu0 0.0
        %305 = vmatprep.subr.mxu0 0.0
        %306 = vmatpush1.msra.mxu0 0.0
        %307 = vmatprep.subr.mxu0 0.0
        %308 = vmatpush1.msra.mxu0 0.0
        %309 = vmatprep.subr.mxu0 0.0
        %310 = vmatpush1.msra.mxu0 0.0
        %311 = vmatprep.subr.mxu0 0.0
        %312 = vmatpush1.msra.mxu0 0.0
        %313 = vmatprep.subr.mxu0 0.0
        %314 = vmatpush1.msra.mxu0 0.0
        %315 = vmatprep.subr.mxu0 0.0
        %316 = vmatpush1.msra.mxu0 0.0
        %317 = vmatprep.subr.mxu0 0.0
        %318 = vmatpush1.msra.mxu0 0.0
        %319 = vmatprep.subr.mxu0 0.0
        %320 = vmatpush1.msra.mxu0 0.0
        %321 = vmatprep.subr.mxu0 0.0
        %322 = vmatpush1.msra.mxu0 0.0
        %323 = vmatprep.subr.mxu0 0.0
        %324 = vmatpush1.msra.mxu0 0.0
        %325 = vmatprep.subr.mxu0 0.0
        %326 = vmatpush1.msra.mxu0 0.0
        %327 = vmatprep.subr.mxu0 0.0
        %328 = vmatpush1.msra.mxu0 0.0
        %329 = vmatprep.subr.mxu0 0.0
        %330 = vmatpush1.msra.mxu0 0.0
        %331 = vmatprep.subr.mxu0 0.0
        %332 = vmatpush1.msra.mxu0 0.0
        %333 = vmatprep.subr.mxu0 0.0
        %334 = vmatpush1.msra.mxu0 0.0
        %335 = vmatprep.subr.mxu0 0.0
        %336 = vmatpush1.msra.mxu0 0.0
        %337 = vmatprep.subr.mxu0 0.0
        %338 = vmatpush1.msra.mxu0 0.0
        %339 = vmatprep.subr.mxu0 0.0
        %340 = vmatpush1.msra.mxu0 0.0
        %341 = vmatprep.subr.mxu0 0.0
        %342 = vmatpush1.msra.mxu0 0.0
        %343 = vmatprep.subr.mxu0 0.0
        %344 = vmatpush1.msra.mxu0 0.0
        %345 = vmatprep.subr.mxu0 0.0
        %346 = vmatpush1.msra.mxu0 0.0
        %347 = vmatprep.subr.mxu0 0.0
        %348 = vmatpush1.msra.mxu0 0.0
        %349 = vmatprep.mubr.f32.mxu0 0.0
        %350 = vmatmul.mubr.f32.gmra.mrb[0].mxu0 %v283
        %v351 = vpop.f32.mrb[0].mxu0
        %v352 = vadd.f32 %v279, %v351
        %v353 = vpop.f32.mrb[0].mxu0
        %354 = vdwg.mxu0
        %v355 = vmul.f32 %v352, 0.5
        %v356 = vmul.f32 %v352, 0.70710677
        %v357 = vand.u32 2147483647, %v356
        %v358 = vmul.f32 %v357, 0.3275911
        %v359 = vadd.f32 %v358, 1.0
        %v360 = vrcp.pop %v359
        %v361 = vmul.f32 %v360, 1.0614054
        %v362 = vadd.f32 %v361, -1.4531521
        %v363 = vmul.f32 %v360, %v362
        %v364 = vadd.f32 %v363, 1.4214138
        %v365 = vmul.f32 %v360, %v364
        %v366 = vadd.f32 %v365, -0.28449672
        %v367 = vmul.f32 %v360, %v366
        %v368 = vadd.f32 %v367, 0.2548296
        %v369 = vmul.f32 %v360, %v368
        %v370 = vsub.f32 0.0, %v357
        %v371 = vmul.f32 %v370, %v357
        %v372 = vmul.f32 %v371, 1.442695
        %v373 = vpow.pop %v372
        %v374 = vmul.f32 %v369, %v373
        %v375 = vsub.f32 1.0, %v374
        %vm376 = vcmp.lt.f32.partialorder %v356, 0.0
        %v377 = vsub.f32 0.0, %v375
        %v378 = vsel %vm376, %v377, %v375
        %v379 = vadd.f32 %v378, 1.0
        %v380 = vmul.f32 %v355, %v379
        %v381 = vld [vmem:[#allocation7] sm:$0xff]
        %v382 = vld [vmem:[#allocation7 + $0x8] sm:$0xff]
        %v383 = vld [vmem:[#allocation7 + $0x10] sm:$0xff]
        %v384 = vld [vmem:[#allocation7 + $0x18] sm:$0xff]
        %v385 = vld [vmem:[#allocation7 + $0x20] sm:$0xff]
        %v386 = vld [vmem:[#allocation7 + $0x28] sm:$0xff]
        %v387 = vld [vmem:[#allocation7 + $0x30] sm:$0xff]
        %v388 = vld [vmem:[#allocation7 + $0x38] sm:$0xff]
        %v389 = vld [vmem:[%s4] sm:$0x1]
        %v391 = vlaneseq
        %v392 = vshrl.u32 %v391, 7
        %v393 = vsub.s32 0, %v392
        %v394 = vrot.slane %v389, %v393
        %vm396 = vcmask 523264
        %v398 = vsel %vm396, %v380, 0
        %400 = vmatprep.subr.mxu0 0.0
        %401 = vmatpush1.msra.mxu0 %v381
        %402 = vmatprep.subr.mxu0 0.0
        %403 = vmatpush1.msra.mxu0 %v382
        %404 = vmatprep.subr.mxu0 0.0
        %405 = vmatpush1.msra.mxu0 %v383
        %406 = vmatprep.subr.mxu0 0.0
        %407 = vmatpush1.msra.mxu0 %v384
        %408 = vmatprep.subr.mxu0 0.0
        %409 = vmatpush1.msra.mxu0 %v385
        %410 = vmatprep.subr.mxu0 0.0
        %411 = vmatpush1.msra.mxu0 %v386
        %412 = vmatprep.subr.mxu0 0.0
        %413 = vmatpush1.msra.mxu0 %v387
        %414 = vmatprep.subr.mxu0 0.0
        %415 = vmatpush1.msra.mxu0 %v388
        %416 = vmatprep.subr.mxu0 0.0
        %417 = vmatpush1.msra.mxu0 0.0
        %418 = vmatprep.subr.mxu0 0.0
        %419 = vmatpush1.msra.mxu0 0.0
        %420 = vmatprep.subr.mxu0 0.0
        %421 = vmatpush1.msra.mxu0 0.0
        %422 = vmatprep.subr.mxu0 0.0
        %423 = vmatpush1.msra.mxu0 0.0
        %424 = vmatprep.subr.mxu0 0.0
        %425 = vmatpush1.msra.mxu0 0.0
        %426 = vmatprep.subr.mxu0 0.0
        %427 = vmatpush1.msra.mxu0 0.0
        %428 = vmatprep.subr.mxu0 0.0
        %429 = vmatpush1.msra.mxu0 0.0
        %430 = vmatprep.subr.mxu0 0.0
        %431 = vmatpush1.msra.mxu0 0.0
        %432 = vmatprep.subr.mxu0 0.0
        %433 = vmatpush1.msra.mxu0 0.0
        %434 = vmatprep.subr.mxu0 0.0
        %435 = vmatpush1.msra.mxu0 0.0
        %436 = vmatprep.subr.mxu0 0.0
        %437 = vmatpush1.msra.mxu0 0.0
        %438 = vmatprep.subr.mxu0 0.0
        %439 = vmatpush1.msra.mxu0 0.0
        %440 = vmatprep.subr.mxu0 0.0
        %441 = vmatpush1.msra.mxu0 0.0
        %442 = vmatprep.subr.mxu0 0.0
        %443 = vmatpush1.msra.mxu0 0.0
        %444 = vmatprep.subr.mxu0 0.0
        %445 = vmatpush1.msra.mxu0 0.0
        %446 = vmatprep.subr.mxu0 0.0
        %447 = vmatpush1.msra.mxu0 0.0
        %448 = vmatprep.subr.mxu0 0.0
        %449 = vmatpush1.msra.mxu0 0.0
        %450 = vmatprep.subr.mxu0 0.0
        %451 = vmatpush1.msra.mxu0 0.0
        %452 = vmatprep.subr.mxu0 0.0
        %453 = vmatpush1.msra.mxu0 0.0
        %454 = vmatprep.subr.mxu0 0.0
        %455 = vmatpush1.msra.mxu0 0.0
        %456 = vmatprep.subr.mxu0 0.0
        %457 = vmatpush1.msra.mxu0 0.0
        %458 = vmatprep.subr.mxu0 0.0
        %459 = vmatpush1.msra.mxu0 0.0
        %460 = vmatprep.subr.mxu0 0.0
        %461 = vmatpush1.msra.mxu0 0.0
        %462 = vmatprep.subr.mxu0 0.0
        %463 = vmatpush1.msra.mxu0 0.0
        %464 = vmatprep.mubr.f32.mxu0 0.0
        %465 = vmatmul.mubr.f32.gmra.mrb[0].mxu0 %v398
        %v466 = vpop.f32.mrb[0].mxu0
        %v467 = vadd.f32 %v394, %v466
        %v468 = vpop.f32.mrb[0].mxu0
        %469 = vdwg.mxu0
        %470 = vst [vmem:[%s268] sm:$0xff] %v467
        %s471 = sand.u32 %s141, 1
        %s472 = scalar_lea.sflag [#allocation4], %s471
        %s473 = sand.u32 %s141, 1
        %s474 = smul.addr %s473, 8
        %s475 = scalar_lea.vmem [#allocation8], %s474
        // Predicated region
        $region53: #{tpu_custom_call.1} parent=39 // pred_check
          %p476 = pneg %p151
        $region54: #{tpu_custom_call.1} parent=39 // pred_check_branch
          %478 = sbr.rel (%p476) target = $region56
        $region55: #{tpu_custom_call.1} parent=39 // pred_region
          %s480 = ssub.s32 128, 128
          %481 = vsyncadd %s472, %s480
          %s482 = smul.addr %s23, 128
          %s483 = scalar_lea.hbm %s5, %s482
          %s485 = sshll.u32 %s475, 4
          %s486 = int_to_ptr.vmem [resolvable:$true] %s485
          %488 = dma.vmem_to_hbm [thread:$0]  %s486, 128, %s483, %s472
        $region56: #{tpu_custom_call.1} parent=39 // pred_fallthru
          _
      $region40: #{tpu_custom_call.1} parent=5 // pred_fallthru
        _
      %p489 = scmp.le.s32.totalorder 2, %s18
      // Predicated region
      $region57: #{tpu_custom_call.1} parent=5 // pred_check
        %p490 = pneg %p489
      $region58: #{tpu_custom_call.1} parent=5 // pred_check_branch
        %492 = sbr.rel (%p490) target = $region60
      $region59: #{tpu_custom_call.1} parent=5 // pred_region
        %s493 = ssub.s32 %s18, 2
        // Predicated region
        $region61: #{tpu_custom_call.1} parent=59 // pred_check
          %p494 = pneg %p157
        $region62: #{tpu_custom_call.1} parent=59 // pred_check_branch
          %496 = sbr.rel (%p494) target = $region64
        $region63: #{tpu_custom_call.1} parent=59 // pred_region
          %s497 = sand.u32 %s142, 1
          %s498 = scalar_lea.sflag [#allocation4], %s497
          %s499 = sand.u32 %s142, 1
          %s500 = smul.addr %s499, 8
          %s501 = scalar_lea.vmem [#allocation8], %s500
          %502 = dma.done %s498, 128
        $region64: #{tpu_custom_call.1} parent=59 // pred_fallthru
          _
      $region60: #{tpu_custom_call.1} parent=5 // pred_fallthru
        _
    $region6: #{tpu_custom_call.1} parent=1 // loop_footer
      %s22 = sadd.s32 1, %s18
    $region7: #{tpu_custom_call.1} parent=1 // loop_footer_branch
      %17 = sbr.rel target = $region3
    $region8: #{tpu_custom_call.1} parent=1 // loop_exit
      _
    %503 = vsyncpa [#allocation3], 1
    %s504 = scalar_lea.sflag [#allocation3], 1
    %505 = vsyncpa %s504, 1
    %506 = vsyncpa [#allocation6], 1
    %507 = vsyncpa [#allocation4], 1
    %s508 = scalar_lea.sflag [#allocation4], 1
    %509 = vsyncpa %s508, 1

</llo_original>
